<compile_context>
chip_gen: v5e
topology: v5e:2x2
jax: 0.10.0
libtpu: 0.0.40
codegen_flags: <defaults>
</compile_context>

<pallas_src>
import functools
import math

import jax
import jax.numpy as jnp
from jax.experimental import pallas as pl
from jax.experimental.pallas import tpu as pltpu


HIDDEN = 250
HIDDEN_PAD = 256          # 250 -> 256 (2 full 128-lane vregs per row)
TB_DEFAULT = 1024         # throughput batch tile (sweep 512/1024/2048; mult of 256)
SMALL_B = 256             # latency regime threshold: single-step grid below this


def _round_up(x, m):
    return (x + m - 1) // m * m


def _cdiv(a, b):
    return -(-a // b)


def _actor_kernel(x_ref, w1_ref, b1_ref, w2_ref, b2_ref, w3_ref, b3_ref,
                  out_ref, *, action_limit_v, action_limit_w, passthrough):
    # Cast activations to bf16 for the MXU; accumulate in f32.
    x = x_ref[...].astype(jnp.bfloat16)

    # fa1 + relu
    h1 = jnp.dot(x, w1_ref[...], preferred_element_type=jnp.float32) + b1_ref[...]
    h1 = jnp.maximum(h1, 0.0).astype(jnp.bfloat16)

    # fa2 + relu
    h2 = jnp.dot(h1, w2_ref[...], preferred_element_type=jnp.float32) + b2_ref[...]
    h2 = jnp.maximum(h2, 0.0).astype(jnp.bfloat16)

    # fa3 (raw action logits, padded to a narrow 8-lane slab)
    a = jnp.dot(h2, w3_ref[...], preferred_element_type=jnp.float32) + b3_ref[...]

    # action[:, 0] = sigmoid(a0) * action_limit_v
    # action[:, 1] = tanh(a1)    * action_limit_w
    # columns >= 2 (when they exist) pass through as raw logits.
    # Single-tanh epilogue: sigmoid(x) = 0.5 * (tanh(x/2) + 1).
    col = jax.lax.broadcasted_iota(jnp.int32, a.shape, dimension=1)
    is_v = col == 0
    t = jnp.tanh(jnp.where(is_v, 0.5 * a, a))
    scaled = jnp.where(is_v,
                       (t + 1.0) * jnp.float32(0.5 * action_limit_v),
                       t * jnp.float32(action_limit_w))
    if passthrough:
        out_ref[...] = jnp.where(col < 2, scaled, a)
    else:
        out_ref[...] = scaled


def _choose_tile(B):
    """Return (tile_rows, pad_to_tile). Latency path pads; throughput path is ragged."""
    if B <= SMALL_B:
        # Latency regime: one grid step, rows rounded to 16 (bf16 sublane packing).
        return _round_up(max(B, 16), 16), True
    # Throughput regime: multiple of 256 for the MXU M dim, capped so the grid
    # always has >= 2 steps (keeps both v7x TensorCores busy).
    tb = min(TB_DEFAULT, _round_up(_cdiv(B, 2), 256))
    return max(tb, 256), False


def actor_forward(state, params, action_dim, action_limit_v, action_limit_w):
    """state: [B, state_dim] float32 (batched path of the PyTorch forward).

    A 1-D state of shape [state_dim] is also accepted (reshaped to batch 1),
    matching the unbatched branch of the PyTorch module.
    """
    squeeze = state.ndim == 1
    if squeeze:
        state = state[None, :]

    w1, b1, w2, b2, w3, b3 = params
    B, state_dim = state.shape
    ad_pad = w3.shape[1]

    tb, pad_small = _choose_tile(B)
    if pad_small and B != tb:
        # Tiny pad on the latency path only (single grid step).
        state = jnp.pad(state, ((0, tb - B), (0, 0)))
    b_total = state.shape[0]
    grid = (pl.cdiv(b_total, tb),)

    kernel = functools.partial(
        _actor_kernel,
        action_limit_v=float(action_limit_v),
        action_limit_w=float(action_limit_w),
        passthrough=action_dim > 2,
    )

    tile_spec = lambda shp: pl.BlockSpec(shp, lambda i: (i, 0))      # batch-tiled
    resident = lambda shp: pl.BlockSpec(shp, lambda i: (0, 0))       # VMEM-resident

    out = pl.pallas_call(
        kernel,
        out_shape=jax.ShapeDtypeStruct((b_total, ad_pad), jnp.float32),
        grid=grid,
        in_specs=[
            tile_spec((tb, state_dim)),
            resident(w1.shape), resident(b1.shape),
            resident(w2.shape), resident(b2.shape),
            resident(w3.shape), resident(b3.shape),
        ],
        out_specs=tile_spec((tb, ad_pad)),
        compiler_params=pltpu.CompilerParams(
            dimension_semantics=("parallel",),
            vmem_limit_bytes=32 << 20),
    )(state, w1, b1, w2, b2, w3, b3)

    out = out[:B, :action_dim]
    if squeeze:
        out = out[0]
    return out


def init_actor_params(key, state_dim, action_dim, hidden=HIDDEN,
                      hidden_pad=HIDDEN_PAD):
    """Xavier-uniform weights + 0.01 biases (as in the PyTorch __init__).

    Weights are stored transposed vs. PyTorch ([in, out]), zero-padded to
    lane/sublane-aligned shapes, and cast to bfloat16. Biases stay f32,
    zero-padded. The action dim is padded only to 8 lanes (not 128) so the
    output writeback stream stays small.
    """
    action_pad = max(8, _round_up(action_dim, 8))

    def xavier(k, fin, fout, fin_pad, fout_pad):
        bound = math.sqrt(6.0 / (fin + fout))
        w = jax.random.uniform(k, (fin, fout), jnp.float32, -bound, bound)
        wp = jnp.zeros((fin_pad, fout_pad), jnp.float32).at[:fin, :fout].set(w)
        return wp.astype(jnp.bfloat16)

    def bias(fout, fout_pad):
        return jnp.zeros((1, fout_pad), jnp.float32).at[:, :fout].set(0.01)

    k1, k2, k3 = jax.random.split(key, 3)
    w1 = xavier(k1, state_dim, hidden, state_dim, hidden_pad)
    b1 = bias(hidden, hidden_pad)
    w2 = xavier(k2, hidden, hidden, hidden_pad, hidden_pad)
    b2 = bias(hidden, hidden_pad)
    w3 = xavier(k3, hidden, action_dim, hidden_pad, action_pad)
    b3 = bias(action_dim, action_pad)
    return (w1, b1, w2, b2, w3, b3)


def actor_reference(state, params, action_dim, action_limit_v, action_limit_w):
    """Pure-JAX reference mirroring the kernel's bf16/f32 arithmetic."""
    w1, b1, w2, b2, w3, b3 = params
    x = state.astype(jnp.bfloat16)
    h1 = jnp.maximum(jnp.dot(x, w1, preferred_element_type=jnp.float32) + b1, 0.0)
    h1 = h1.astype(jnp.bfloat16)
    h2 = jnp.maximum(jnp.dot(h1, w2, preferred_element_type=jnp.float32) + b2, 0.0)
    h2 = h2.astype(jnp.bfloat16)
    a = jnp.dot(h2, w3, preferred_element_type=jnp.float32) + b3
    a = a[:, :action_dim]
    a = a.at[:, 0].set(jax.nn.sigmoid(a[:, 0]) * action_limit_v)
    if action_dim >= 2:
        a = a.at[:, 1].set(jnp.tanh(a[:, 1]) * action_limit_w)
    return a


if __name__ == "__main__":
    # Small shapes consistent with the module: state_dim=16, action_dim=2, batch=2.
    state_dim, action_dim, batch = 16, 2, 2
    action_limit_v, action_limit_w = 0.22, 2.0

    key = jax.random.PRNGKey(0)
    pkey, xkey = jax.random.split(key)
    params = init_actor_params(pkey, state_dim, action_dim)
    state = jax.random.normal(xkey, (batch, state_dim), jnp.float32)

    out = actor_forward(state, params, action_dim, action_limit_v, action_limit_w)
    out = jax.block_until_ready(out)

    ref = actor_reference(state, params, action_dim, action_limit_v, action_limit_w)
    assert out.shape == (batch, action_dim), out.shape
    assert jnp.allclose(out, ref, atol=1e-3, rtol=1e-3), (out, ref)

    print("KERNEL_OK")
</pallas_src>

<mosaic_0001>
module attributes {stable_mosaic.version = 11 : i64} {
  func.func @_actor_kernel(%arg0: i32, %arg1: memref<16x16xf32, #tpu.memory_space<vmem>>, %arg2: memref<16x256xbf16, #tpu.memory_space<vmem>>, %arg3: memref<1x256xf32, #tpu.memory_space<vmem>>, %arg4: memref<256x256xbf16, #tpu.memory_space<vmem>>, %arg5: memref<1x256xf32, #tpu.memory_space<vmem>>, %arg6: memref<256x8xbf16, #tpu.memory_space<vmem>>, %arg7: memref<1x8xf32, #tpu.memory_space<vmem>>, %arg8: memref<16x8xf32, #tpu.memory_space<vmem>>) attributes {dimension_semantics = [#tpu.dimension_semantics<parallel>], iteration_bounds = array<i64: 1>, scalar_prefetch = 0 : i64, scratch_operands = 0 : i64, tpu.core_type = #tpu.core_type<tc>, window_params = [{transform_indices = @transform_0, window_bounds = array<i64: 16, 16>}, {pipeline_mode = #tpu.pipeline_mode<synchronous>, transform_indices = @transform_1, window_bounds = array<i64: 16, 256>}, {pipeline_mode = #tpu.pipeline_mode<synchronous>, transform_indices = @transform_2, window_bounds = array<i64: 1, 256>}, {pipeline_mode = #tpu.pipeline_mode<synchronous>, transform_indices = @transform_3, window_bounds = array<i64: 256, 256>}, {pipeline_mode = #tpu.pipeline_mode<synchronous>, transform_indices = @transform_4, window_bounds = array<i64: 1, 256>}, {pipeline_mode = #tpu.pipeline_mode<synchronous>, transform_indices = @transform_5, window_bounds = array<i64: 256, 8>}, {pipeline_mode = #tpu.pipeline_mode<synchronous>, transform_indices = @transform_6, window_bounds = array<i64: 1, 8>}, {transform_indices = @transform_7, window_bounds = array<i64: 16, 8>}]} {
    %c0 = arith.constant 0 : index
    %c0_0 = arith.constant 0 : index
    %0 = vector.load %arg1[%c0, %c0_0] : memref<16x16xf32, #tpu.memory_space<vmem>>, vector<16x16xf32>
    %1 = arith.truncf %0 : vector<16x16xf32> to vector<16x16xbf16>
    %c0_1 = arith.constant 0 : index
    %c0_2 = arith.constant 0 : index
    %2 = vector.load %arg2[%c0_1, %c0_2] : memref<16x256xbf16, #tpu.memory_space<vmem>>, vector<16x256xbf16>
    %cst = arith.constant dense<0.000000e+00> : vector<16x256xf32>
    %3 = tpu.matmul %1, %2, %cst {dimension_numbers = #tpu.dot_dimension_numbers<[1], [0], [0], [1], [0, 0, 1, 1], [], []>} : vector<16x16xbf16>, vector<16x256xbf16>, vector<16x256xf32> -> vector<16x256xf32>
    %c0_3 = arith.constant 0 : index
    %c0_4 = arith.constant 0 : index
    %4 = vector.load %arg3[%c0_3, %c0_4] : memref<1x256xf32, #tpu.memory_space<vmem>>, vector<1x256xf32>
    %5 = vector.broadcast %4 : vector<1x256xf32> to vector<16x256xf32>
    %6 = arith.addf %3, %5 : vector<16x256xf32>
    %cst_5 = arith.constant 0.000000e+00 : f32
    %7 = vector.broadcast %cst_5 : f32 to vector<16x256xf32>
    %8 = arith.maximumf %6, %7 : vector<16x256xf32>
    %9 = arith.truncf %8 : vector<16x256xf32> to vector<16x256xbf16>
    %c0_6 = arith.constant 0 : index
    %c0_7 = arith.constant 0 : index
    %10 = vector.load %arg4[%c0_6, %c0_7] : memref<256x256xbf16, #tpu.memory_space<vmem>>, vector<256x256xbf16>
    %cst_8 = arith.constant dense<0.000000e+00> : vector<16x256xf32>
    %11 = tpu.matmul %9, %10, %cst_8 {dimension_numbers = #tpu.dot_dimension_numbers<[1], [0], [0], [1], [0, 0, 1, 1], [], []>} : vector<16x256xbf16>, vector<256x256xbf16>, vector<16x256xf32> -> vector<16x256xf32>
    %c0_9 = arith.constant 0 : index
    %c0_10 = arith.constant 0 : index
    %12 = vector.load %arg5[%c0_9, %c0_10] : memref<1x256xf32, #tpu.memory_space<vmem>>, vector<1x256xf32>
    %13 = vector.broadcast %12 : vector<1x256xf32> to vector<16x256xf32>
    %14 = arith.addf %11, %13 : vector<16x256xf32>
    %cst_11 = arith.constant 0.000000e+00 : f32
    %15 = vector.broadcast %cst_11 : f32 to vector<16x256xf32>
    %16 = arith.maximumf %14, %15 : vector<16x256xf32>
    %17 = arith.truncf %16 : vector<16x256xf32> to vector<16x256xbf16>
    %c0_12 = arith.constant 0 : index
    %c0_13 = arith.constant 0 : index
    %18 = vector.load %arg6[%c0_12, %c0_13] : memref<256x8xbf16, #tpu.memory_space<vmem>>, vector<256x8xbf16>
    %cst_14 = arith.constant dense<0.000000e+00> : vector<16x8xf32>
    %19 = tpu.matmul %17, %18, %cst_14 {dimension_numbers = #tpu.dot_dimension_numbers<[1], [0], [0], [1], [0, 0, 1, 1], [], []>} : vector<16x256xbf16>, vector<256x8xbf16>, vector<16x8xf32> -> vector<16x8xf32>
    %c0_15 = arith.constant 0 : index
    %c0_16 = arith.constant 0 : index
    %20 = vector.load %arg7[%c0_15, %c0_16] : memref<1x8xf32, #tpu.memory_space<vmem>>, vector<1x8xf32>
    %21 = vector.broadcast %20 : vector<1x8xf32> to vector<16x8xf32>
    %22 = arith.addf %19, %21 : vector<16x8xf32>
    %23 = tpu.iota {dimensions = array<i32: 1>} : vector<16x8xi32>
    %c0_i32 = arith.constant 0 : i32
    %24 = vector.broadcast %c0_i32 : i32 to vector<16x8xi32>
    %25 = arith.cmpi eq, %23, %24 : vector<16x8xi32>
    %cst_17 = arith.constant 5.000000e-01 : f32
    %26 = vector.broadcast %cst_17 : f32 to vector<16x8xf32>
    %27 = arith.mulf %26, %22 : vector<16x8xf32>
    %28 = arith.select %25, %27, %22 : vector<16x8xi1>, vector<16x8xf32>
    %29 = math.tanh %28 : vector<16x8xf32>
    %cst_18 = arith.constant 1.000000e+00 : f32
    %30 = vector.broadcast %cst_18 : f32 to vector<16x8xf32>
    %31 = arith.addf %29, %30 : vector<16x8xf32>
    %cst_19 = arith.constant 1.100000e-01 : f32
    %32 = vector.broadcast %cst_19 : f32 to vector<16x8xf32>
    %33 = arith.mulf %31, %32 : vector<16x8xf32>
    %cst_20 = arith.constant 2.000000e+00 : f32
    %34 = vector.broadcast %cst_20 : f32 to vector<16x8xf32>
    %35 = arith.mulf %29, %34 : vector<16x8xf32>
    %36 = arith.select %25, %33, %35 : vector<16x8xi1>, vector<16x8xf32>
    %c0_21 = arith.constant 0 : index
    %c0_22 = arith.constant 0 : index
    %37 = vector.load %arg8[%c0_21, %c0_22] : memref<16x8xf32, #tpu.memory_space<vmem>>, vector<16x8xf32>
    tpu.vector_store %arg8[%c0_21, %c0_22], %36 {strides = array<i32>} : memref<16x8xf32, #tpu.memory_space<vmem>>, vector<16x8xf32>,
    return
  }
  func.func @transform_0(%arg0: i32) -> (i32, i32) {
    %c0_i32 = arith.constant 0 : i32
    %c0_i32_0 = arith.constant 0 : i32
    return %arg0, %c0_i32 : i32, i32
  }
  func.func @transform_1(%arg0: i32) -> (i32, i32) {
    %c0_i32 = arith.constant 0 : i32
    %c0_i32_0 = arith.constant 0 : i32
    %c0_i32_1 = arith.constant 0 : i32
    return %c0_i32, %c0_i32_0 : i32, i32
  }
  func.func @transform_2(%arg0: i32) -> (i32, i32) {
    %c0_i32 = arith.constant 0 : i32
    %c0_i32_0 = arith.constant 0 : i32
    %c0_i32_1 = arith.constant 0 : i32
    return %c0_i32, %c0_i32_0 : i32, i32
  }
  func.func @transform_3(%arg0: i32) -> (i32, i32) {
    %c0_i32 = arith.constant 0 : i32
    %c0_i32_0 = arith.constant 0 : i32
    %c0_i32_1 = arith.constant 0 : i32
    return %c0_i32, %c0_i32_0 : i32, i32
  }
  func.func @transform_4(%arg0: i32) -> (i32, i32) {
    %c0_i32 = arith.constant 0 : i32
    %c0_i32_0 = arith.constant 0 : i32
    %c0_i32_1 = arith.constant 0 : i32
    return %c0_i32, %c0_i32_0 : i32, i32
  }
  func.func @transform_5(%arg0: i32) -> (i32, i32) {
    %c0_i32 = arith.constant 0 : i32
    %c0_i32_0 = arith.constant 0 : i32
    %c0_i32_1 = arith.constant 0 : i32
    return %c0_i32, %c0_i32_0 : i32, i32
  }
  func.func @transform_6(%arg0: i32) -> (i32, i32) {
    %c0_i32 = arith.constant 0 : i32
    %c0_i32_0 = arith.constant 0 : i32
    %c0_i32_1 = arith.constant 0 : i32
    return %c0_i32, %c0_i32_0 : i32, i32
  }
  func.func @transform_7(%arg0: i32) -> (i32, i32) {
    %c0_i32 = arith.constant 0 : i32
    %c0_i32_0 = arith.constant 0 : i32
    return %arg0, %c0_i32 : i32, i32
  }
}

</mosaic_0001>

<llo_original>
// kernel: tpu_custom_call.1
$region0: #{tpu_custom_call.1}
  #allocation0 [shape = 'u32[]', space=smem, size = 0x4, offset = 0x4, fixed_abs, tag = 'smem constant byte address 0x4 - core index']
  #allocation1 [shape = 'u32[72,128]{1,0:T(1,128)}', space=vmem, size = 0x9000, scoped, tag = 'internal scratch']
  %s0 = inlined_call_operand.vmem [shape: f32[16,16], index: 0, kind: input, shape index: {}]
  %s1 = inlined_call_operand.vmem [shape: bf16[16,256], index: 1, kind: input, shape index: {}]
  %s2 = inlined_call_operand.vmem [shape: f32[1,256], index: 2, kind: input, shape index: {}]
  %s3 = inlined_call_operand.hbm [shape: bf16[256,256], index: 3, kind: input, shape index: {}]
  %s4 = inlined_call_operand.vmem [shape: f32[1,256], index: 4, kind: input, shape index: {}]
  %s5 = inlined_call_operand.vmem [shape: bf16[256,8], index: 5, kind: input, shape index: {}]
  %s6 = inlined_call_operand.vmem [shape: f32[1,8], index: 6, kind: input, shape index: {}]
  %s7 = inlined_call_operand.vmem [shape: f32[16,8], index: 7, kind: output, shape index: {}]
  %s8 = sld [smem:[#allocation0]]
  $region42: #{tpu_custom_call.1} parent=0
    _
  %s10 = ssub.s32 1, %s8
  %s11 = scalar_select 0, %s10, %s8
  $region1: #{tpu_custom_call.1} parent=0
    #allocation2 [shape = 'u8[131072]{0}', space=vmem, size = 0x20000, scoped, tag = 'input window, operand 3, single buffered']
    #allocation3 [shape = 's32[1]{0}', space=sflag, size = 0x4, scoped, tag = 'scoped memory for tpu_custom_call.1']
    %12 = vsyncpa [#allocation3], 0
    // Predicated region
    $region2: #{tpu_custom_call.1} parent=1 // pred_check
      _
    $region3: #{tpu_custom_call.1} parent=1 // pred_check_branch
      %14 = sbr.rel (0) target = $region5
    $region4: #{tpu_custom_call.1} parent=1 // pred_region
      _
    $region5: #{tpu_custom_call.1} parent=1 // pred_fallthru
      _
    // Predicated region
    $region6: #{tpu_custom_call.1} parent=1 // pred_check
      _
    $region7: #{tpu_custom_call.1} parent=1 // pred_check_branch
      %16 = sbr.rel (0) target = $region9
    $region8: #{tpu_custom_call.1} parent=1 // pred_region
      _
    $region9: #{tpu_custom_call.1} parent=1 // pred_fallthru
      _
    // Predicated region
    $region10: #{tpu_custom_call.1} parent=1 // pred_check
      _
    $region11: #{tpu_custom_call.1} parent=1 // pred_check_branch
      %18 = sbr.rel (0) target = $region13
    $region12: #{tpu_custom_call.1} parent=1 // pred_region
      _
    $region13: #{tpu_custom_call.1} parent=1 // pred_fallthru
      _
    // Predicated region
    $region14: #{tpu_custom_call.1} parent=1 // pred_check
      _
    $region15: #{tpu_custom_call.1} parent=1 // pred_check_branch
      %20 = sbr.rel (0) target = $region17
    $region16: #{tpu_custom_call.1} parent=1 // pred_region
      %22 = vsyncadd [#allocation3], 0
      %s23 = sshll.u32 %s3, 4
      %s24 = int_to_ptr.hbm [resolvable:$true] %s23
      %s25 = sshll.u32 [#allocation2], 4
      %s26 = int_to_ptr.vmem [resolvable:$true] %s25
      %31 = dma.hbm_to_vmem [thread:$0]  %s24, 4096, %s26, [#allocation3], 128, 128, 8
    $region17: #{tpu_custom_call.1} parent=1 // pred_fallthru
      _
    // Predicated region
    $region18: #{tpu_custom_call.1} parent=1 // pred_check
      _
    $region19: #{tpu_custom_call.1} parent=1 // pred_check_branch
      %33 = sbr.rel (0) target = $region21
    $region20: #{tpu_custom_call.1} parent=1 // pred_region
      _
    $region21: #{tpu_custom_call.1} parent=1 // pred_fallthru
      _
    // Predicated region
    $region22: #{tpu_custom_call.1} parent=1 // pred_check
      _
    $region23: #{tpu_custom_call.1} parent=1 // pred_check_branch
      %35 = sbr.rel (0) target = $region25
    $region24: #{tpu_custom_call.1} parent=1 // pred_region
      _
    $region25: #{tpu_custom_call.1} parent=1 // pred_fallthru
      _
    // Predicated region
    $region26: #{tpu_custom_call.1} parent=1 // pred_check
      _
    $region27: #{tpu_custom_call.1} parent=1 // pred_check_branch
      %37 = sbr.rel (0) target = $region29
    $region28: #{tpu_custom_call.1} parent=1 // pred_region
      _
    $region29: #{tpu_custom_call.1} parent=1 // pred_fallthru
      _
    // Predicated region
    $region30: #{tpu_custom_call.1} parent=1 // pred_check
      _
    $region31: #{tpu_custom_call.1} parent=1 // pred_check_branch
      %39 = sbr.rel (0) target = $region33
    $region32: #{tpu_custom_call.1} parent=1 // pred_region
      %41 = dma.done [#allocation3], 4096
    $region33: #{tpu_custom_call.1} parent=1 // pred_fallthru
      _
    %v43 = vld [vmem:[%s0] sm:$0xff]
    %v44 = vld [vmem:[%s0 + $0x8] sm:$0xff]
    %v45 = vpack.c.bf16 %v44, %v43
    %v46 = vld [vmem:[%s1] sm:$0xff]
    %v47 = vld [vmem:[%s1 + $0x8] sm:$0xff]
    %v48 = vld [vmem:[%s2] sm:$0x3]
    %v50 = vperm.slane %v48, 0
    %v51 = vperm.slane %v48, 1
    %v56 = vunpack.c.l.b16 %v46
    %v57 = vunpack.c.h.b16 %v46
    %v58 = vunpack.c.l.b16 %v47
    %v59 = vunpack.c.h.b16 %v47
    %v60 = vpack.c.b16 %v58, %v56
    %v61 = vpack.c.b16 %v59, %v57
    %vm64 = vcmask 130048
    %v66 = vsel %vm64, %v45, 0
    %68 = vmatpush.bf16.msra.mxu0 0
    %69 = vmatpush.bf16.msra.mxu0 0
    %70 = vmatpush.bf16.msra.mxu0 0
    %71 = vmatpush.bf16.msra.mxu0 0
    %72 = vmatpush.bf16.msra.mxu0 0
    %73 = vmatpush.bf16.msra.mxu0 0
    %74 = vmatpush.bf16.msra.mxu0 0
    %75 = vmatpush.bf16.msra.mxu0 %v60
    %76 = vmatmul.bf16.gmra.mxu0 %v66
    %v77 = vpop.f32.mrf.mxu0
    %v78 = vadd.f32 %v50, %v77
    %v79 = vpop.f32.mrf.mxu0
    %v80 = vadd.f32 %v50, %v79
    %81 = vdwg.mxu0
    %82 = vmatpush.bf16.msra.mxu0 0
    %83 = vmatpush.bf16.msra.mxu0 0
    %84 = vmatpush.bf16.msra.mxu0 0
    %85 = vmatpush.bf16.msra.mxu0 0
    %86 = vmatpush.bf16.msra.mxu0 0
    %87 = vmatpush.bf16.msra.mxu0 0
    %88 = vmatpush.bf16.msra.mxu0 0
    %89 = vmatpush.bf16.msra.mxu0 %v61
    %90 = vmatmul.bf16.gmra.mxu0 %v66
    %v91 = vpop.f32.mrf.mxu0
    %v92 = vadd.f32 %v51, %v91
    %v93 = vpop.f32.mrf.mxu0
    %v94 = vadd.f32 %v51, %v93
    %95 = vdwg.mxu0
    %v96 = vmax.f32 %v78, 0.0
    %v97 = vmax.f32 %v92, 0.0
    %v98 = vmax.f32 %v80, 0.0
    %v99 = vmax.f32 %v94, 0.0
    %v100 = vpack.c.bf16 %v98, %v96
    %v101 = vpack.c.bf16 %v99, %v97
    %v102 = vld [vmem:[#allocation2] sm:$0xff]
    %v103 = vld [vmem:[#allocation2 + $0x8] sm:$0xff]
    %v104 = vld [vmem:[#allocation2 + $0x10] sm:$0xff]
    %v105 = vld [vmem:[#allocation2 + $0x18] sm:$0xff]
    %v106 = vld [vmem:[#allocation2 + $0x20] sm:$0xff]
    %v107 = vld [vmem:[#allocation2 + $0x28] sm:$0xff]
    %v108 = vld [vmem:[#allocation2 + $0x30] sm:$0xff]
    %v109 = vld [vmem:[#allocation2 + $0x38] sm:$0xff]
    %v110 = vld [vmem:[#allocation2 + $0x40] sm:$0xff]
    %v111 = vld [vmem:[#allocation2 + $0x48] sm:$0xff]
    %v112 = vld [vmem:[#allocation2 + $0x50] sm:$0xff]
    %v113 = vld [vmem:[#allocation2 + $0x58] sm:$0xff]
    %v114 = vld [vmem:[#allocation2 + $0x60] sm:$0xff]
    %v115 = vld [vmem:[#allocation2 + $0x68] sm:$0xff]
    %v116 = vld [vmem:[#allocation2 + $0x70] sm:$0xff]
    %v117 = vld [vmem:[#allocation2 + $0x78] sm:$0xff]
    %v118 = vld [vmem:[#allocation2 + $0x80] sm:$0xff]
    %v119 = vld [vmem:[#allocation2 + $0x88] sm:$0xff]
    %v120 = vld [vmem:[#allocation2 + $0x90] sm:$0xff]
    %v121 = vld [vmem:[#allocation2 + $0x98] sm:$0xff]
    %v122 = vld [vmem:[#allocation2 + $0xa0] sm:$0xff]
    %v123 = vld [vmem:[#allocation2 + $0xa8] sm:$0xff]
    %v124 = vld [vmem:[#allocation2 + $0xb0] sm:$0xff]
    %v125 = vld [vmem:[#allocation2 + $0xb8] sm:$0xff]
    %v126 = vld [vmem:[#allocation2 + $0xc0] sm:$0xff]
    %v127 = vld [vmem:[#allocation2 + $0xc8] sm:$0xff]
    %v128 = vld [vmem:[#allocation2 + $0xd0] sm:$0xff]
    %v129 = vld [vmem:[#allocation2 + $0xd8] sm:$0xff]
    %v130 = vld [vmem:[#allocation2 + $0xe0] sm:$0xff]
    %v131 = vld [vmem:[#allocation2 + $0xe8] sm:$0xff]
    %v132 = vld [vmem:[#allocation2 + $0xf0] sm:$0xff]
    %v133 = vld [vmem:[#allocation2 + $0xf8] sm:$0xff]
    %v134 = vld [vmem:[%s4] sm:$0x3]
    %v136 = vperm.slane %v134, 0
    %v137 = vperm.slane %v134, 1
    %v172 = vunpack.c.l.b16 %v102
    %v173 = vunpack.c.h.b16 %v102
    %v174 = vunpack.c.l.b16 %v103
    %v175 = vunpack.c.h.b16 %v103
    %v176 = vunpack.c.l.b16 %v104
    %v177 = vunpack.c.h.b16 %v104
    %v178 = vunpack.c.l.b16 %v105
    %v179 = vunpack.c.h.b16 %v105
    %v180 = vunpack.c.l.b16 %v106
    %v181 = vunpack.c.h.b16 %v106
    %v182 = vunpack.c.l.b16 %v107
    %v183 = vunpack.c.h.b16 %v107
    %v184 = vunpack.c.l.b16 %v108
    %v185 = vunpack.c.h.b16 %v108
    %v186 = vunpack.c.l.b16 %v109
    %v187 = vunpack.c.h.b16 %v109
    %v188 = vunpack.c.l.b16 %v110
    %v189 = vunpack.c.h.b16 %v110
    %v190 = vunpack.c.l.b16 %v111
    %v191 = vunpack.c.h.b16 %v111
    %v192 = vunpack.c.l.b16 %v112
    %v193 = vunpack.c.h.b16 %v112
    %v194 = vunpack.c.l.b16 %v113
    %v195 = vunpack.c.h.b16 %v113
    %v196 = vunpack.c.l.b16 %v114
    %v197 = vunpack.c.h.b16 %v114
    %v198 = vunpack.c.l.b16 %v115
    %v199 = vunpack.c.h.b16 %v115
    %v200 = vunpack.c.l.b16 %v116
    %v201 = vunpack.c.h.b16 %v116
    %v202 = vunpack.c.l.b16 %v117
    %v203 = vunpack.c.h.b16 %v117
    %v204 = vunpack.c.l.b16 %v118
    %v205 = vunpack.c.h.b16 %v118
    %v206 = vunpack.c.l.b16 %v119
    %v207 = vunpack.c.h.b16 %v119
    %v208 = vunpack.c.l.b16 %v120
    %v209 = vunpack.c.h.b16 %v120
    %v210 = vunpack.c.l.b16 %v121
    %v211 = vunpack.c.h.b16 %v121
    %v212 = vunpack.c.l.b16 %v122
    %v213 = vunpack.c.h.b16 %v122
    %v214 = vunpack.c.l.b16 %v123
    %v215 = vunpack.c.h.b16 %v123
    %v216 = vunpack.c.l.b16 %v124
    %v217 = vunpack.c.h.b16 %v124
    %v218 = vunpack.c.l.b16 %v125
    %v219 = vunpack.c.h.b16 %v125
    %v220 = vunpack.c.l.b16 %v126
    %v221 = vunpack.c.h.b16 %v126
    %v222 = vunpack.c.l.b16 %v127
    %v223 = vunpack.c.h.b16 %v127
    %v224 = vunpack.c.l.b16 %v128
    %v225 = vunpack.c.h.b16 %v128
    %v226 = vunpack.c.l.b16 %v129
    %v227 = vunpack.c.h.b16 %v129
    %v228 = vunpack.c.l.b16 %v130
    %v229 = vunpack.c.h.b16 %v130
    %v230 = vunpack.c.l.b16 %v131
    %v231 = vunpack.c.h.b16 %v131
    %v232 = vunpack.c.l.b16 %v132
    %v233 = vunpack.c.h.b16 %v132
    %v234 = vunpack.c.l.b16 %v133
    %v235 = vunpack.c.h.b16 %v133
    %v236 = vpack.c.b16 %v174, %v172
    %v237 = vpack.c.b16 %v175, %v173
    %v238 = vpack.c.b16 %v178, %v176
    %v239 = vpack.c.b16 %v179, %v177
    %v240 = vpack.c.b16 %v182, %v180
    %v241 = vpack.c.b16 %v183, %v181
    %v242 = vpack.c.b16 %v186, %v184
    %v243 = vpack.c.b16 %v187, %v185
    %v244 = vpack.c.b16 %v190, %v188
    %v245 = vpack.c.b16 %v191, %v189
    %v246 = vpack.c.b16 %v194, %v192
    %v247 = vpack.c.b16 %v195, %v193
    %v248 = vpack.c.b16 %v198, %v196
    %v249 = vpack.c.b16 %v199, %v197
    %v250 = vpack.c.b16 %v202, %v200
    %v251 = vpack.c.b16 %v203, %v201
    %v252 = vpack.c.b16 %v206, %v204
    %v253 = vpack.c.b16 %v207, %v205
    %v254 = vpack.c.b16 %v210, %v208
    %v255 = vpack.c.b16 %v211, %v209
    %v256 = vpack.c.b16 %v214, %v212
    %v257 = vpack.c.b16 %v215, %v213
    %v258 = vpack.c.b16 %v218, %v216
    %v259 = vpack.c.b16 %v219, %v217
    %v260 = vpack.c.b16 %v222, %v220
    %v261 = vpack.c.b16 %v223, %v221
    %v262 = vpack.c.b16 %v226, %v224
    %v263 = vpack.c.b16 %v227, %v225
    %v264 = vpack.c.b16 %v230, %v228
    %v265 = vpack.c.b16 %v231, %v229
    %v266 = vpack.c.b16 %v234, %v232
    %v267 = vpack.c.b16 %v235, %v233
    %300 = vmatpush.bf16.msra.mxu0 %v250
    %301 = vmatpush.bf16.msra.mxu0 %v248
    %302 = vmatpush.bf16.msra.mxu0 %v246
    %303 = vmatpush.bf16.msra.mxu0 %v244
    %304 = vmatpush.bf16.msra.mxu0 %v242
    %305 = vmatpush.bf16.msra.mxu0 %v240
    %306 = vmatpush.bf16.msra.mxu0 %v238
    %307 = vmatpush.bf16.msra.mxu0 %v236
    %308 = vmatmul.bf16.gmra.mxu0 %v100
    %v309 = vpop.f32.mrf.mxu0
    %v310 = vadd.f32 %v136, %v309
    %v311 = vpop.f32.mrf.mxu0
    %v312 = vadd.f32 %v136, %v311
    %313 = vdwg.mxu0
    %314 = vmatpush.bf16.msra.mxu0 %v266
    %315 = vmatpush.bf16.msra.mxu0 %v264
    %316 = vmatpush.bf16.msra.mxu0 %v262
    %317 = vmatpush.bf16.msra.mxu0 %v260
    %318 = vmatpush.bf16.msra.mxu0 %v258
    %319 = vmatpush.bf16.msra.mxu0 %v256
    %320 = vmatpush.bf16.msra.mxu0 %v254
    %321 = vmatpush.bf16.msra.mxu0 %v252
    %322 = vmatmul.bf16.gmra.mxu0 %v101
    %v323 = vpop.f32.mrf.mxu0
    %v324 = vadd.f32 %v310, %v323
    %v325 = vpop.f32.mrf.mxu0
    %v326 = vadd.f32 %v312, %v325
    %327 = vdwg.mxu0
    %328 = vmatpush.bf16.msra.mxu0 %v251
    %329 = vmatpush.bf16.msra.mxu0 %v249
    %330 = vmatpush.bf16.msra.mxu0 %v247
    %331 = vmatpush.bf16.msra.mxu0 %v245
    %332 = vmatpush.bf16.msra.mxu0 %v243
    %333 = vmatpush.bf16.msra.mxu0 %v241
    %334 = vmatpush.bf16.msra.mxu0 %v239
    %335 = vmatpush.bf16.msra.mxu0 %v237
    %336 = vmatmul.bf16.gmra.mxu0 %v100
    %v337 = vpop.f32.mrf.mxu0
    %v338 = vadd.f32 %v137, %v337
    %v339 = vpop.f32.mrf.mxu0
    %v340 = vadd.f32 %v137, %v339
    %341 = vdwg.mxu0
    %342 = vmatpush.bf16.msra.mxu0 %v267
    %343 = vmatpush.bf16.msra.mxu0 %v265
    %344 = vmatpush.bf16.msra.mxu0 %v263
    %345 = vmatpush.bf16.msra.mxu0 %v261
    %346 = vmatpush.bf16.msra.mxu0 %v259
    %347 = vmatpush.bf16.msra.mxu0 %v257
    %348 = vmatpush.bf16.msra.mxu0 %v255
    %349 = vmatpush.bf16.msra.mxu0 %v253
    %350 = vmatmul.bf16.gmra.mxu0 %v101
    %v351 = vpop.f32.mrf.mxu0
    %v352 = vadd.f32 %v338, %v351
    %v353 = vpop.f32.mrf.mxu0
    %v354 = vadd.f32 %v340, %v353
    %355 = vdwg.mxu0
    %v356 = vmax.f32 %v324, 0.0
    %v357 = vmax.f32 %v352, 0.0
    %v358 = vmax.f32 %v326, 0.0
    %v359 = vmax.f32 %v354, 0.0
    %v360 = vpack.c.bf16 %v358, %v356
    %v361 = vpack.c.bf16 %v359, %v357
    %v362 = vld [vmem:[%s5] sm:$0xf]
    %v363 = vld [vmem:[%s5 + $0x4] sm:$0xf]
    %v364 = vld [vmem:[%s5 + $0x8] sm:$0xf]
    %v365 = vld [vmem:[%s5 + $0xc] sm:$0xf]
    %v366 = vld [vmem:[%s5 + $0x10] sm:$0xf]
    %v367 = vld [vmem:[%s5 + $0x14] sm:$0xf]
    %v368 = vld [vmem:[%s5 + $0x18] sm:$0xf]
    %v369 = vld [vmem:[%s5 + $0x1c] sm:$0xf]
    %v370 = vld [vmem:[%s5 + $0x20] sm:$0xf]
    %v371 = vld [vmem:[%s5 + $0x24] sm:$0xf]
    %v372 = vld [vmem:[%s5 + $0x28] sm:$0xf]
    %v373 = vld [vmem:[%s5 + $0x2c] sm:$0xf]
    %v374 = vld [vmem:[%s5 + $0x30] sm:$0xf]
    %v375 = vld [vmem:[%s5 + $0x34] sm:$0xf]
    %v376 = vld [vmem:[%s5 + $0x38] sm:$0xf]
    %v377 = vld [vmem:[%s5 + $0x3c] sm:$0xf]
    %v378 = vld [vmem:[%s5 + $0x40] sm:$0xf]
    %v379 = vld [vmem:[%s5 + $0x44] sm:$0xf]
    %v380 = vld [vmem:[%s5 + $0x48] sm:$0xf]
    %v381 = vld [vmem:[%s5 + $0x4c] sm:$0xf]
    %v382 = vld [vmem:[%s5 + $0x50] sm:$0xf]
    %v383 = vld [vmem:[%s5 + $0x54] sm:$0xf]
    %v384 = vld [vmem:[%s5 + $0x58] sm:$0xf]
    %v385 = vld [vmem:[%s5 + $0x5c] sm:$0xf]
    %v386 = vld [vmem:[%s5 + $0x60] sm:$0xf]
    %v387 = vld [vmem:[%s5 + $0x64] sm:$0xf]
    %v388 = vld [vmem:[%s5 + $0x68] sm:$0xf]
    %v389 = vld [vmem:[%s5 + $0x6c] sm:$0xf]
    %v390 = vld [vmem:[%s5 + $0x70] sm:$0xf]
    %v391 = vld [vmem:[%s5 + $0x74] sm:$0xf]
    %v392 = vld [vmem:[%s5 + $0x78] sm:$0xf]
    %v393 = vld [vmem:[%s5 + $0x7c] sm:$0xf]
    %v394 = vld [vmem:[%s6] sm:$0x1]
    %v396 = vperm.slane %v394, 0
    %v430 = vunpack.c.l.b16 %v362
    %v431 = vunpack.c.l.b16 %v363
    %v432 = vunpack.c.l.b16 %v364
    %v433 = vunpack.c.l.b16 %v365
    %v434 = vunpack.c.l.b16 %v366
    %v435 = vunpack.c.l.b16 %v367
    %v436 = vunpack.c.l.b16 %v368
    %v437 = vunpack.c.l.b16 %v369
    %v438 = vunpack.c.l.b16 %v370
    %v439 = vunpack.c.l.b16 %v371
    %v440 = vunpack.c.l.b16 %v372
    %v441 = vunpack.c.l.b16 %v373
    %v442 = vunpack.c.l.b16 %v374
    %v443 = vunpack.c.l.b16 %v375
    %v444 = vunpack.c.l.b16 %v376
    %v445 = vunpack.c.l.b16 %v377
    %v446 = vunpack.c.l.b16 %v378
    %v447 = vunpack.c.l.b16 %v379
    %v448 = vunpack.c.l.b16 %v380
    %v449 = vunpack.c.l.b16 %v381
    %v450 = vunpack.c.l.b16 %v382
    %v451 = vunpack.c.l.b16 %v383
    %v452 = vunpack.c.l.b16 %v384
    %v453 = vunpack.c.l.b16 %v385
    %v454 = vunpack.c.l.b16 %v386
    %v455 = vunpack.c.l.b16 %v387
    %v456 = vunpack.c.l.b16 %v388
    %v457 = vunpack.c.l.b16 %v389
    %v458 = vunpack.c.l.b16 %v390
    %v459 = vunpack.c.l.b16 %v391
    %v460 = vunpack.c.l.b16 %v392
    %v461 = vunpack.c.l.b16 %v393
    %v462 = vpack.c.b16 %v431, %v430
    %v463 = vpack.c.b16 %v433, %v432
    %v464 = vpack.c.b16 %v435, %v434
    %v465 = vpack.c.b16 %v437, %v436
    %v466 = vpack.c.b16 %v439, %v438
    %v467 = vpack.c.b16 %v441, %v440
    %v468 = vpack.c.b16 %v443, %v442
    %v469 = vpack.c.b16 %v445, %v444
    %v470 = vpack.c.b16 %v447, %v446
    %v471 = vpack.c.b16 %v449, %v448
    %v472 = vpack.c.b16 %v451, %v450
    %v473 = vpack.c.b16 %v453, %v452
    %v474 = vpack.c.b16 %v455, %v454
    %v475 = vpack.c.b16 %v457, %v456
    %v476 = vpack.c.b16 %v459, %v458
    %v477 = vpack.c.b16 %v461, %v460
    %494 = vmatpush.bf16.msra.mxu0 %v469
    %495 = vmatpush.bf16.msra.mxu0 %v468
    %496 = vmatpush.bf16.msra.mxu0 %v467
    %497 = vmatpush.bf16.msra.mxu0 %v466
    %498 = vmatpush.bf16.msra.mxu0 %v465
    %499 = vmatpush.bf16.msra.mxu0 %v464
    %500 = vmatpush.bf16.msra.mxu0 %v463
    %501 = vmatpush.bf16.msra.mxu0 %v462
    %502 = vmatmul.bf16.gmra.mxu0 %v360
    %v503 = vpop.f32.mrf.mxu0
    %v504 = vadd.f32 %v396, %v503
    %v505 = vpop.f32.mrf.mxu0
    %v506 = vadd.f32 %v396, %v505
    %507 = vdwg.mxu0
    %508 = vmatpush.bf16.msra.mxu0 %v477
    %509 = vmatpush.bf16.msra.mxu0 %v476
    %510 = vmatpush.bf16.msra.mxu0 %v475
    %511 = vmatpush.bf16.msra.mxu0 %v474
    %512 = vmatpush.bf16.msra.mxu0 %v473
    %513 = vmatpush.bf16.msra.mxu0 %v472
    %514 = vmatpush.bf16.msra.mxu0 %v471
    %515 = vmatpush.bf16.msra.mxu0 %v470
    %516 = vmatmul.bf16.gmra.mxu0 %v361
    %v517 = vpop.f32.mrf.mxu0
    %v518 = vadd.f32 %v504, %v517
    %v519 = vpop.f32.mrf.mxu0
    %v520 = vadd.f32 %v506, %v519
    %521 = vdwg.mxu0
    %v522 = vlaneseq
    %v523 = vand.u32 %v522, 127
    %vm524 = vcmp.eq.s32.totalorder %v523, 0
    %v525 = vmul.f32 %v518, 0.5
    %v526 = vmul.f32 %v520, 0.5
    %v527 = vsel %vm524, %v525, %v518
    %v528 = vsel %vm524, %v526, %v520
    %v529 = vtanh.pop %v527
    %v530 = vtanh.pop %v528
    %v531 = vadd.f32 %v529, 1.0
    %v532 = vadd.f32 %v530, 1.0
    %v533 = vmul.f32 %v531, 0.11
    %v534 = vmul.f32 %v532, 0.11
    %v535 = vmul.f32 %v529, 2.0
    %v536 = vmul.f32 %v530, 2.0
    %v537 = vsel %vm524, %v533, %v535
    %v538 = vsel %vm524, %v534, %v536
    %vm539 = vcmask 64512
    %540 = vst.msk [vmem:[%s7] sm:$0xff] %vm539, %v537
    %541 = vst.msk [vmem:[%s7 + $0x8] sm:$0xff] %vm539, %v538
    // Predicated region
    $region34: #{tpu_custom_call.1} parent=1 // pred_check
      _
    $region35: #{tpu_custom_call.1} parent=1 // pred_check_branch
      %543 = sbr.rel (0) target = $region37
    $region36: #{tpu_custom_call.1} parent=1 // pred_region
      _
    $region37: #{tpu_custom_call.1} parent=1 // pred_fallthru
      _
    // Predicated region
    $region38: #{tpu_custom_call.1} parent=1 // pred_check
      _
    $region39: #{tpu_custom_call.1} parent=1 // pred_check_branch
      %545 = sbr.rel (0) target = $region41
    $region40: #{tpu_custom_call.1} parent=1 // pred_region
      _
    $region41: #{tpu_custom_call.1} parent=1 // pred_fallthru
      _
    %546 = vsyncpa [#allocation3], 1

</llo_original>
